<compile_context>
chip_gen: v7x
topology: tpu7x:2x2x1
jax: 0.10.0
libtpu: 0.0.40
codegen_flags: <defaults>
</compile_context>

<pallas_src>
import numpy as np
import jax
import jax.numpy as jnp
from jax.experimental import pallas as pl
from jax.experimental.pallas import tpu as pltpu


# -----------------------------------------------------------------------------
# deterministic parameter init (kaiming-normal, like init_parameters())
# -----------------------------------------------------------------------------
_MASTER_KEY = jax.random.PRNGKey(42)
_PARAM_COUNTER = [0]


def _next_key():
    _PARAM_COUNTER[0] += 1
    return jax.random.fold_in(_MASTER_KEY, _PARAM_COUNTER[0])


def kaiming(shape):
    fan_in = int(np.prod(shape[1:]))
    std = float(np.sqrt(2.0 / fan_in))
    return jax.random.normal(_next_key(), shape, jnp.float32) * std


# -----------------------------------------------------------------------------
# tile-size pickers.  Legality rules: a block's last dim must be a multiple of
# 128 or equal the full array dim; the second-to-last must be a multiple of 8
# or equal the full array dim.  K tiles must divide K exactly (no garbage in
# the reduction), so we only tile K when an exact 128-aligned divisor exists.
# -----------------------------------------------------------------------------
def _pick_row_tile(dim, pref):
    """Sublane-constrained dim: multiple-of-8 divisor of dim, or the full dim."""
    if dim <= pref:
        return dim
    t = pref
    while t >= 8:
        if dim % t == 0:
            return t
        t -= 8
    return pref  # rare non-dividing fallback: partial edge block (writes masked)


def _pick_lane_tile(dim, pref=256):
    """Lane-constrained dim: multiple-of-128 divisor of dim, or the full dim."""
    if dim <= pref:
        return dim
    for t in (pref, 128):
        if dim % t == 0:
            return t
    return dim


def _pick_k_tile(dim, pref=512):
    """Reduction tile: must divide K exactly; otherwise keep full K resident."""
    if dim <= 2048:
        return dim
    for t in (pref, 256, 128):
        if dim % t == 0:
            return t
    return dim


# -----------------------------------------------------------------------------
# Pallas kernels
# -----------------------------------------------------------------------------
def _make_matmul_kernel(pre_relu, post_relu):
    """Tiled (M,K)x(K,N) matmul, f32 accumulator, fused BN affine (+ReLU) epilogue."""

    def kernel(a_ref, b_ref, scale_ref, shift_ref, o_ref, acc_ref):
        k = pl.program_id(2)

        @pl.when(k == 0)
        def _():
            acc_ref[...] = jnp.zeros_like(acc_ref)

        a = a_ref[...]
        if pre_relu:
            # applied to the raw (bf16) activation tile of this K step
            a = jnp.maximum(a, 0)
        acc_ref[...] += jnp.dot(a, b_ref[...], preferred_element_type=jnp.float32)

        @pl.when(k == pl.num_programs(2) - 1)
        def _():
            y = acc_ref[...] * scale_ref[...] + shift_ref[...]
            if post_relu:
                y = jnp.maximum(y, 0.0)
            o_ref[...] = y.astype(o_ref.dtype)

    return kernel


def pallas_matmul_affine(a, b, scale, shift, pre_relu=False, post_relu=False):
    """out = relu?( relu?(a) @ b * scale + shift ).  bf16 MXU operands, f32 epilogue.

    a:(M,K)  b:(K,N)  scale/shift:(N,).  No padded copies: tiles are chosen so the
    exact logical shapes are legal blocks; edge blocks (if any) are masked."""
    M, K = a.shape
    Kb, N = b.shape
    assert K == Kb
    a = a.astype(jnp.bfloat16)
    b = b.astype(jnp.bfloat16)
    scale = scale.reshape(1, N).astype(jnp.float32)
    shift = shift.reshape(1, N).astype(jnp.float32)

    tm = _pick_row_tile(M, 256)
    tn = _pick_lane_tile(N, 256)
    tk = _pick_k_tile(K, 512)
    grid = (pl.cdiv(M, tm), pl.cdiv(N, tn), pl.cdiv(K, tk))

    return pl.pallas_call(
        _make_matmul_kernel(pre_relu, post_relu),
        out_shape=jax.ShapeDtypeStruct((M, N), jnp.float32),
        grid=grid,
        in_specs=[
            pl.BlockSpec((tm, tk), lambda i, j, k: (i, k)),
            pl.BlockSpec((tk, tn), lambda i, j, k: (k, j)),
            pl.BlockSpec((1, tn), lambda i, j, k: (0, j)),
            pl.BlockSpec((1, tn), lambda i, j, k: (0, j)),
        ],
        out_specs=pl.BlockSpec((tm, tn), lambda i, j, k: (i, j)),
        scratch_shapes=[pltpu.VMEM((tm, tn), jnp.float32)],
        compiler_params=pltpu.CompilerParams(
            dimension_semantics=("parallel", "parallel", "arbitrary")),
    )(a, b, scale, shift)


def _make_pool_kernel(kk, mode):
    def max_kernel(p_ref, o_ref):
        acc = p_ref[:, 0, :]
        for t in range(1, kk):
            acc = jnp.maximum(acc, p_ref[:, t, :])
        o_ref[...] = acc

    def avg_kernel(p_ref, r_ref, o_ref):
        acc = p_ref[:, 0, :]
        for t in range(1, kk):
            acc = acc + p_ref[:, t, :]
        o_ref[...] = acc * r_ref[...]

    return max_kernel if mode == "max" else avg_kernel


def pallas_window_pool(p, recip, mode):
    """p: (M, K*K, C) window taps; recip: (M, 1) = 1/valid_count (avg only)."""
    M, KK, C = p.shape
    tM = _pick_row_tile(M, 256)
    grid = (pl.cdiv(M, tM),)
    params = pltpu.CompilerParams(dimension_semantics=("parallel",))
    if mode == "max":
        return pl.pallas_call(
            _make_pool_kernel(KK, "max"),
            out_shape=jax.ShapeDtypeStruct((M, C), jnp.float32),
            grid=grid,
            in_specs=[pl.BlockSpec((tM, KK, C), lambda i: (i, 0, 0))],
            out_specs=pl.BlockSpec((tM, C), lambda i: (i, 0)),
            compiler_params=params,
        )(p)
    return pl.pallas_call(
        _make_pool_kernel(KK, "avg"),
        out_shape=jax.ShapeDtypeStruct((M, C), jnp.float32),
        grid=grid,
        in_specs=[pl.BlockSpec((tM, KK, C), lambda i: (i, 0, 0)),
                  pl.BlockSpec((tM, 1), lambda i: (i, 0))],
        out_specs=pl.BlockSpec((tM, C), lambda i: (i, 0)),
        compiler_params=params,
    )(p, recip)


def _make_sum_kernel(n):
    def kernel(*refs):
        out_ref = refs[n]
        acc = refs[0][...]
        for i in range(1, n):
            acc = acc + refs[i][...]
        out_ref[...] = acc
    return kernel


def pallas_sum(xs):
    """Elementwise sum of same-shape NHWC tensors; operands streamed separately."""
    if len(xs) == 1:
        return xs[0]
    shape = xs[0].shape
    C = shape[-1]
    flats = [x.reshape(-1, C) for x in xs]          # free reshapes
    M = flats[0].shape[0]
    tM = _pick_row_tile(M, 512)
    grid = (pl.cdiv(M, tM),)
    out = pl.pallas_call(
        _make_sum_kernel(len(xs)),
        out_shape=jax.ShapeDtypeStruct((M, C), jnp.float32),
        grid=grid,
        in_specs=[pl.BlockSpec((tM, C), lambda i: (i, 0)) for _ in flats],
        out_specs=pl.BlockSpec((tM, C), lambda i: (i, 0)),
        compiler_params=pltpu.CompilerParams(dimension_semantics=("parallel",)),
    )(*flats)
    return out.reshape(shape)


def _make_gap_fc_kernel(inv_hw):
    def kernel(x_ref, w_ref, b_ref, o_ref):
        pooled = jnp.sum(x_ref[0], axis=0, keepdims=True) * inv_hw       # (1, C) f32
        o_ref[0] = jnp.dot(pooled, w_ref[...],
                           preferred_element_type=jnp.float32) + b_ref[...]
    return kernel


def pallas_gap_classifier(x, w, b):
    """Fused AdaptiveAvgPool2d(1) + Linear: NHWC -> (N, num_labels)."""
    N, H, W, C = x.shape
    L = w.shape[1]
    xr = x.reshape(N, H * W, C)                      # free reshape, no transpose
    b2 = b.reshape(1, L).astype(jnp.float32)
    out = pl.pallas_call(
        _make_gap_fc_kernel(1.0 / float(H * W)),
        out_shape=jax.ShapeDtypeStruct((N, 1, L), jnp.float32),
        grid=(N,),
        in_specs=[pl.BlockSpec((1, H * W, C), lambda n: (n, 0, 0)),
                  pl.BlockSpec((C, L), lambda n: (0, 0)),
                  pl.BlockSpec((1, L), lambda n: (0, 0))],
        out_specs=pl.BlockSpec((1, 1, L), lambda n: (n, 0, 0)),
        compiler_params=pltpu.CompilerParams(dimension_semantics=("parallel",)),
    )(xr, w.astype(jnp.float32), b2)
    return out.reshape(N, L)


# -----------------------------------------------------------------------------
# im2col glue + conv / pool wrappers
# -----------------------------------------------------------------------------
def extract_patches(x, k, stride, padding, pad_value=0.0):
    """x: NHWC -> (N, Ho, Wo, k, k, C) tap tensor via pure slicing/stacking."""
    N, H, W, C = x.shape
    xp = jnp.pad(x, ((0, 0), (padding, padding), (padding, padding), (0, 0)),
                 constant_values=pad_value)
    Ho = (H + 2 * padding - k) // stride + 1
    Wo = (W + 2 * padding - k) // stride + 1
    rows = []
    for di in range(k):
        cols = []
        for dj in range(k):
            cols.append(xp[:, di:di + stride * Ho:stride, dj:dj + stride * Wo:stride, :])
        rows.append(jnp.stack(cols, axis=3))
    patches = jnp.stack(rows, axis=3)                # (N, Ho, Wo, k, k, C)
    return patches, Ho, Wo


def conv2d_bn(x, w, scale, shift, stride, padding, pre_relu=False, post_relu=False):
    """Conv2d(bias=False) + folded eval-mode BatchNorm (+ optional pre/post ReLU).

    x: NHWC f32, w: (Cout, Cin, k, k) (PyTorch weight layout)."""
    N, H, W, C = x.shape
    Cout, Cin, k, _ = w.shape
    xb = x.astype(jnp.bfloat16)                      # halve HBM traffic of the im2col stream
    if k == 1 and padding == 0:
        xs = xb[:, ::stride, ::stride, :]
        Ho, Wo = xs.shape[1], xs.shape[2]
        a = xs.reshape(N * Ho * Wo, C)               # free reshape for stride 1
    else:
        # TODO(synk): im2col still materializes a k*k-amplified bf16 tensor in HBM;
        # fully fusing the tap gather into the matmul needs manual shifted-window
        # DMA (memory_space=pl.ANY), which Blocked index_maps cannot express.
        patches, Ho, Wo = extract_patches(xb, k, stride, padding, 0.0)
        a = patches.reshape(N * Ho * Wo, k * k * C)
    b = jnp.transpose(w, (2, 3, 1, 0)).reshape(k * k * Cin, Cout)
    out = pallas_matmul_affine(a, b, scale, shift, pre_relu, post_relu)
    return out.reshape(N, Ho, Wo, Cout)


def pool2d(x, k, stride, padding, mode):
    """max/avg pool (avg with count_include_pad=False, as in the reference)."""
    N, H, W, C = x.shape
    pad_val = -1e30 if mode == "max" else 0.0
    patches, Ho, Wo = extract_patches(x, k, stride, padding, pad_val)
    M = N * Ho * Wo
    p = patches.reshape(M, k * k, C)                 # free reshape, no transpose pass
    if mode == "avg":
        ones = jnp.ones((N, H, W, 1), jnp.float32)
        cnt, _, _ = extract_patches(ones, k, stride, padding, 0.0)
        recip = 1.0 / cnt.reshape(M, k * k).sum(axis=1, keepdims=True)
    else:
        recip = None
    out = pallas_window_pool(p, recip, mode)
    return out.reshape(N, Ho, Wo, C)


# -----------------------------------------------------------------------------
# modules (parameter containers; compute routed through the Pallas kernels)
# -----------------------------------------------------------------------------
class ConvBNReLU:
    def __init__(self, cin, cout, k, stride, padding, pre_relu=False, post_relu=False):
        self.w = kaiming((cout, cin, k, k))
        self.gamma = jnp.ones((cout,), jnp.float32)
        self.beta = jnp.zeros((cout,), jnp.float32)
        self.mean = jnp.zeros((cout,), jnp.float32)
        self.var = jnp.ones((cout,), jnp.float32)
        self.stride, self.padding = stride, padding
        self.pre_relu, self.post_relu = pre_relu, post_relu

    def _affine(self):
        scale = self.gamma / jnp.sqrt(self.var + 1e-5)
        shift = self.beta - self.mean * scale
        return scale, shift

    def __call__(self, x):
        scale, shift = self._affine()
        return conv2d_bn(x, self.w, scale, shift, self.stride, self.padding,
                         self.pre_relu, self.post_relu)


def ReLUConvBN(cin, cout, k, stride, padding):
    return ConvBNReLU(cin, cout, k, stride, padding, pre_relu=True)


class FactorizedReduce:
    """ReLU -> two 1x1 stride-2 convs on (x, x[:,1:,1:]) -> channel concat -> BN."""

    def __init__(self, cin, cout):
        self.c1 = cout // 2
        self.c2 = cout - self.c1
        self.w1 = kaiming((self.c1, cin, 1, 1))
        self.w2 = kaiming((self.c2, cin, 1, 1))
        self.gamma = jnp.ones((cout,), jnp.float32)
        self.beta = jnp.zeros((cout,), jnp.float32)
        self.mean = jnp.zeros((cout,), jnp.float32)
        self.var = jnp.ones((cout,), jnp.float32)

    def __call__(self, x):
        scale = self.gamma / jnp.sqrt(self.var + 1e-5)
        shift = self.beta - self.mean * scale
        x_a = x[:, ::2, ::2, :]
        x_b = x[:, 1::2, 1::2, :]
        y1 = conv2d_bn(x_a, self.w1, scale[: self.c1], shift[: self.c1], 1, 0, True)
        y2 = conv2d_bn(x_b, self.w2, scale[self.c1:], shift[self.c1:], 1, 0, True)
        return jnp.concatenate([y1, y2], axis=-1)


class SeqConv:
    # TODO(synk): OP_MAP['seqconvKxK'] definition is not provided in the reference;
    # reconstructed NAO-style as two stacked ReLU-Conv-BN blocks (first carries stride).
    def __init__(self, cin, cout, k, stride, padding):
        self.c1 = ConvBNReLU(cin, cout, k, stride, padding, pre_relu=True)
        self.c2 = ConvBNReLU(cout, cout, k, 1, padding, pre_relu=True)

    def __call__(self, x):
        return self.c2(self.c1(x))


class Node:
    def __init__(self, op_name, shape, channels, stride=1):
        self.op_name = op_name
        self.id_fact_reduce = None
        shape = list(shape)
        if op_name == "seqconv3x3":
            self.op = SeqConv(channels, channels, 3, stride, 1)
            shape = [shape[0] // stride, shape[1] // stride, channels]
        elif op_name == "seqconv5x5":
            self.op = SeqConv(channels, channels, 5, stride, 2)
            shape = [shape[0] // stride, shape[1] // stride, channels]
        elif op_name == "avgpool3x3":
            self.op = lambda x: pool2d(x, 3, stride, 1, "avg")
            shape = [shape[0] // stride, shape[1] // stride, shape[-1]]
        elif op_name == "maxpool3x3":
            self.op = lambda x: pool2d(x, 3, stride, 1, "max")
            shape = [shape[0] // stride, shape[1] // stride, shape[-1]]
        elif op_name == "identity":
            self.op = lambda x: x
            if stride > 1:
                assert stride == 2
                self.id_fact_reduce = FactorizedReduce(shape[-1], channels)
                shape = [shape[0] // stride, shape[1] // stride, channels]
        else:
            raise ValueError(op_name)
        self.out_shape = list(shape)

    def __call__(self, x, step=None):
        out = self.op(x)
        if self.id_fact_reduce is not None:
            out = self.id_fact_reduce(out)
        # DropPath_ is training-only -> identity in eval forward.
        return out


class MaybeCalibrateSize:
    def __init__(self, prev_layers, channels):
        hw = [prev_layers[0][0], prev_layers[1][0]]
        c = [prev_layers[0][-1], prev_layers[1][-1]]
        self.pre0 = None
        self.pre1 = None
        if hw[0] != hw[1]:
            assert hw[0] == 2 * hw[1]
            self.pre0 = FactorizedReduce(c[0], channels)
            out0 = [hw[1], hw[1], channels]
        elif c[0] != channels:
            self.pre0 = ReLUConvBN(c[0], channels, 1, 1, 0)
            out0 = [hw[0], hw[0], channels]
        else:
            out0 = list(prev_layers[0])
        if c[1] != channels:
            self.pre1 = ReLUConvBN(c[1], channels, 1, 1, 0)
        out1 = [hw[1], hw[1], channels]
        self.out_shape = [out0, out1]

    def __call__(self, s0, s1):
        if self.pre0 is not None:
            s0 = self.pre0(s0)
        if self.pre1 is not None:
            s1 = self.pre1(s1)
        return s0, s1


class VertexInputSum:
    # TODO(synk): VertexInputSum source not provided; reconstructed as per-predecessor
    # calibration (FactorizedReduce / 1x1 ReLUConvBN) followed by a Pallas elementwise sum.
    def __init__(self, prev_layers, out_hw, channels, pres):
        self.pres = list(pres)
        self.calibs = {}
        for src in self.pres:
            hw_s, c_s = prev_layers[src][0], prev_layers[src][-1]
            if hw_s != out_hw:
                assert hw_s == 2 * out_hw
                self.calibs[src] = FactorizedReduce(c_s, channels)
            elif c_s != channels:
                self.calibs[src] = ReLUConvBN(c_s, channels, 1, 1, 0)
            else:
                self.calibs[src] = None

    def __call__(self, states):
        xs = []
        for src in self.pres:
            x = states[src]
            if self.calibs[src] is not None:
                x = self.calibs[src](x)
            xs.append(x)
        return pallas_sum(xs)


class FinalCombine:
    def __init__(self, prev_layers, out_hw, channels, concat):
        self.concat = list(concat)
        self.ops = {}
        for i in self.concat:
            if prev_layers[i][0] > out_hw:
                assert prev_layers[i][0] == 2 * out_hw
                self.ops[i] = FactorizedReduce(prev_layers[i][-1], channels)
            else:
                self.ops[i] = None

    def __call__(self, states):
        outs = []
        for i in self.concat:
            x = states[i]
            if self.ops[i] is not None:
                x = self.ops[i](x)
            outs.append(x)
        return jnp.concatenate(outs, axis=-1)


class Cell:
    def __init__(self, spec, prev_layers, channels, reduction):
        assert len(prev_layers) == 2
        self.spec = spec
        self.reduction = reduction
        self.num_vertices = np.shape(spec.matrix)[0]
        prev_layers = [list(prev_layers[0]), list(prev_layers[1])]
        self.maybe_calibrate_size = MaybeCalibrateSize(prev_layers, channels)
        prev_layers = [list(s) for s in self.maybe_calibrate_size.out_shape]
        stride = 2 if reduction else 1
        self.vertex_ops = [None, None]
        self.vertex_sums = [None, None]
        for t in range(2, self.num_vertices - 1):
            shape = min([prev_layers[src] for src in range(t) if spec.matrix[src, t]])
            pres = [src for src in range(t) if spec.matrix[src, t]]
            self.vertex_sums.append(VertexInputSum(prev_layers, shape[0], channels, pres))
            stride_t = stride if sum(
                [src not in [0, 1] for src in range(t) if spec.matrix[src, t]]) == 0 else 1
            op = Node(spec.ops[t], shape, channels, stride_t)
            self.vertex_ops.append(op)
            prev_layers.append(list(op.out_shape))
        self.concat = [src for src in range(self.num_vertices - 1) if spec.matrix[src, -1]]
        out_hw = min([shape[0] // 2 if self.reduction and i in [0, 1] else shape[0]
                      for i, shape in enumerate(prev_layers) if i in self.concat])
        self.final_combine = FinalCombine(prev_layers, out_hw, channels, self.concat)
        self.out_shape = [out_hw, out_hw, channels * len(self.concat)]

    def __call__(self, s0, s1, step=None):
        s0, s1 = self.maybe_calibrate_size(s0, s1)
        states = [s0, s1]
        for t in range(2, self.num_vertices - 1):
            vertex_input = self.vertex_sums[t](states)
            vertex_output = self.vertex_ops[t](vertex_input, step)
            states.append(vertex_output)
        return self.final_combine(states)


class NASNetworkImageNet:
    """Eval-mode forward (dropout / drop-path / aux-head are training-only)."""

    def __init__(self, num_labels, layers, channels, keep_prob, drop_path_keep_prob,
                 use_aux_head, steps, spec, input_hw=32):
        self.num_labels = num_labels
        self.channels = channels
        self.keep_prob = keep_prob
        self.use_aux_head = use_aux_head
        self.conv_spec, self.reduc_spec = spec[0], spec[1]
        self.pool_layers = [layers, 2 * layers + 1]
        self.total_layers = layers * 3 + 2

        c = channels
        self.stem0 = [ConvBNReLU(3, c // 2, 3, 2, 1, post_relu=True),
                      ConvBNReLU(c // 2, c, 3, 2, 1)]
        self.stem1 = ConvBNReLU(c, c, 3, 2, 1, pre_relu=True)

        hw0, hw1 = input_hw // 4, input_hw // 8
        outs = [[hw0, hw0, c], [hw1, hw1, c]]
        c = channels
        self.cells = []
        for i in range(self.total_layers):
            if i not in self.pool_layers:
                cell = Cell(self.conv_spec, outs, c, False)
            else:
                c *= 2
                cell = Cell(self.reduc_spec, outs, c, True)
            self.cells.append(cell)
            outs = [outs[-1], cell.out_shape]
        # TODO(synk): AuxHeadImageNet only runs when self.training; omitted (eval forward).
        self.classifier_w = kaiming((num_labels, outs[-1][-1]))
        self.classifier_b = jnp.zeros((num_labels,), jnp.float32)

    def __call__(self, x_nchw, step=None):
        x = jnp.transpose(x_nchw, (0, 2, 3, 1)).astype(jnp.float32)  # NCHW -> NHWC
        s0 = self.stem0[1](self.stem0[0](x))
        s1 = self.stem1(s0)
        for cell in self.cells:
            s0, s1 = s1, cell(s0, s1, step)
        # Dropout(1 - keep_prob) in eval mode -> identity.  GAP + Linear fused.
        logits = pallas_gap_classifier(s1, self.classifier_w.T, self.classifier_b)
        return logits, None


class ModelSpec:
    def __init__(self, matrix, ops):
        self.matrix = np.array(matrix)
        self.ops = ops


# -----------------------------------------------------------------------------
if __name__ == "__main__":
    matrix = np.array(
        [[0, 0, 1, 0, 0],
         [0, 0, 1, 1, 0],
         [0, 0, 0, 1, 1],
         [0, 0, 0, 0, 1],
         [0, 0, 0, 0, 0]], dtype=np.int32)
    conv_spec = ModelSpec(matrix, [None, None, "seqconv3x3", "avgpool3x3", None])
    reduc_spec = ModelSpec(matrix, [None, None, "seqconv5x5", "maxpool3x3", None])

    model = NASNetworkImageNet(
        num_labels=10, layers=1, channels=16, keep_prob=1.0,
        drop_path_keep_prob=0.9, use_aux_head=False, steps=1,
        spec=(conv_spec, reduc_spec), input_hw=32)

    x = jax.random.normal(jax.random.PRNGKey(0), (2, 3, 32, 32), jnp.float32)
    logits, aux_logits = model(x)
    logits = jax.block_until_ready(logits)
    assert logits.shape == (2, 10)
    assert aux_logits is None
    assert bool(jnp.all(jnp.isfinite(logits)))
    print("KERNEL_OK")
</pallas_src>

<mosaic_0001>
module attributes {stable_mosaic.version = 11 : i64} {
  func.func @kernel(%arg0: i32, %arg1: i32, %arg2: i32, %arg3: memref<256x27xbf16, #tpu.memory_space<vmem>>, %arg4: memref<27x8xbf16, #tpu.memory_space<vmem>>, %arg5: memref<1x8xf32, #tpu.memory_space<vmem>>, %arg6: memref<1x8xf32, #tpu.memory_space<vmem>>, %arg7: memref<256x8xf32, #tpu.memory_space<vmem>>, %arg8: memref<256x8xf32, #tpu.memory_space<vmem>>) attributes {dimension_semantics = [#tpu.dimension_semantics<parallel>, #tpu.dimension_semantics<parallel>, #tpu.dimension_semantics<arbitrary>], iteration_bounds = array<i64: 2, 1, 1>, scalar_prefetch = 0 : i64, scratch_operands = 1 : i64, tpu.core_type = #tpu.core_type<tc>, window_params = [{transform_indices = @transform_0, window_bounds = array<i64: 256, 27>}, {transform_indices = @transform_1, window_bounds = array<i64: 27, 8>}, {transform_indices = @transform_2, window_bounds = array<i64: 1, 8>}, {transform_indices = @transform_3, window_bounds = array<i64: 1, 8>}, {transform_indices = @transform_4, window_bounds = array<i64: 256, 8>}]} {
    %c0_i32 = arith.constant 0 : i32
    %0 = arith.cmpi eq, %arg2, %c0_i32 : i32
    %1 = arith.extui %0 : i1 to i32
    %c0_i32_0 = arith.constant 0 : i32
    %2 = arith.cmpi ne, %1, %c0_i32_0 : i32
    scf.if %2 {
      %cst_10 = arith.constant 0.000000e+00 : f32
      %12 = vector.broadcast %cst_10 : f32 to vector<256x8xf32>
      %c0_11 = arith.constant 0 : index
      %c0_12 = arith.constant 0 : index
      %13 = vector.load %arg8[%c0_11, %c0_12] : memref<256x8xf32, #tpu.memory_space<vmem>>, vector<256x8xf32>
      tpu.vector_store %arg8[%c0_11, %c0_12], %12 {strides = array<i32>} : memref<256x8xf32, #tpu.memory_space<vmem>>, vector<256x8xf32>,
    } else {
    }
    %c0 = arith.constant 0 : index
    %c0_1 = arith.constant 0 : index
    %3 = vector.load %arg3[%c0, %c0_1] : memref<256x27xbf16, #tpu.memory_space<vmem>>, vector<256x27xbf16>
    %c0_2 = arith.constant 0 : index
    %c0_3 = arith.constant 0 : index
    %4 = vector.load %arg8[%c0_2, %c0_3] : memref<256x8xf32, #tpu.memory_space<vmem>>, vector<256x8xf32>
    %c0_4 = arith.constant 0 : index
    %c0_5 = arith.constant 0 : index
    %5 = vector.load %arg4[%c0_4, %c0_5] : memref<27x8xbf16, #tpu.memory_space<vmem>>, vector<27x8xbf16>
    %cst = arith.constant dense<0.000000e+00> : vector<256x8xf32>
    %6 = tpu.matmul %3, %5, %cst {dimension_numbers = #tpu.dot_dimension_numbers<[1], [0], [0], [1], [0, 0, 1, 1], [], []>} : vector<256x27xbf16>, vector<27x8xbf16>, vector<256x8xf32> -> vector<256x8xf32>
    %7 = arith.addf %4, %6 : vector<256x8xf32>
    %c0_6 = arith.constant 0 : index
    %c0_7 = arith.constant 0 : index
    %8 = vector.load %arg8[%c0_6, %c0_7] : memref<256x8xf32, #tpu.memory_space<vmem>>, vector<256x8xf32>
    tpu.vector_store %arg8[%c0_6, %c0_7], %7 {strides = array<i32>} : memref<256x8xf32, #tpu.memory_space<vmem>>, vector<256x8xf32>,
    %c0_i32_8 = arith.constant 0 : i32
    %9 = arith.cmpi eq, %arg2, %c0_i32_8 : i32
    %10 = arith.extui %9 : i1 to i32
    %c0_i32_9 = arith.constant 0 : i32
    %11 = arith.cmpi ne, %10, %c0_i32_9 : i32
    scf.if %11 {
      %c0_10 = arith.constant 0 : index
      %c0_11 = arith.constant 0 : index
      %12 = vector.load %arg8[%c0_10, %c0_11] : memref<256x8xf32, #tpu.memory_space<vmem>>, vector<256x8xf32>
      %c0_12 = arith.constant 0 : index
      %c0_13 = arith.constant 0 : index
      %13 = vector.load %arg5[%c0_12, %c0_13] : memref<1x8xf32, #tpu.memory_space<vmem>>, vector<1x8xf32>
      %14 = vector.broadcast %13 : vector<1x8xf32> to vector<256x8xf32>
      %15 = arith.mulf %12, %14 : vector<256x8xf32>
      %c0_14 = arith.constant 0 : index
      %c0_15 = arith.constant 0 : index
      %16 = vector.load %arg6[%c0_14, %c0_15] : memref<1x8xf32, #tpu.memory_space<vmem>>, vector<1x8xf32>
      %17 = vector.broadcast %16 : vector<1x8xf32> to vector<256x8xf32>
      %18 = arith.addf %15, %17 : vector<256x8xf32>
      %cst_16 = arith.constant 0.000000e+00 : f32
      %19 = vector.broadcast %cst_16 : f32 to vector<256x8xf32>
      %20 = arith.maximumf %18, %19 : vector<256x8xf32>
      %c0_17 = arith.constant 0 : index
      %c0_18 = arith.constant 0 : index
      %21 = vector.load %arg7[%c0_17, %c0_18] : memref<256x8xf32, #tpu.memory_space<vmem>>, vector<256x8xf32>
      tpu.vector_store %arg7[%c0_17, %c0_18], %20 {strides = array<i32>} : memref<256x8xf32, #tpu.memory_space<vmem>>, vector<256x8xf32>,
    } else {
    }
    return
  }
  func.func @transform_0(%arg0: i32, %arg1: i32, %arg2: i32) -> (i32, i32) {
    %c0_i32 = arith.constant 0 : i32
    return %arg0, %arg2 : i32, i32
  }
  func.func @transform_1(%arg0: i32, %arg1: i32, %arg2: i32) -> (i32, i32) {
    %c0_i32 = arith.constant 0 : i32
    return %arg2, %arg1 : i32, i32
  }
  func.func @transform_2(%arg0: i32, %arg1: i32, %arg2: i32) -> (i32, i32) {
    %c0_i32 = arith.constant 0 : i32
    %c0_i32_0 = arith.constant 0 : i32
    return %c0_i32, %arg1 : i32, i32
  }
  func.func @transform_3(%arg0: i32, %arg1: i32, %arg2: i32) -> (i32, i32) {
    %c0_i32 = arith.constant 0 : i32
    %c0_i32_0 = arith.constant 0 : i32
    return %c0_i32, %arg1 : i32, i32
  }
  func.func @transform_4(%arg0: i32, %arg1: i32, %arg2: i32) -> (i32, i32) {
    %c0_i32 = arith.constant 0 : i32
    return %arg0, %arg1 : i32, i32
  }
}

</mosaic_0001>

<llo_original>
// kernel: tpu_custom_call.1
$region0: #{tpu_custom_call.1}
  #allocation0 [shape = 'u32[]', space=smem, size = 0x4, offset = 0x4, fixed_abs, tag = 'smem constant byte address 0x4 - core index']
  #allocation1 [shape = 'u32[144,128]{1,0:T(1,128)}', space=vmem, size = 0x12000, scoped, tag = 'internal scratch']
  #allocation2 [shape = 'f32[256,8]{1,0:T(8,128)}', space=vmem, size = 0x20000, scoped, tag = 'scratch operand']
  %s0 = inlined_call_operand.vmem [shape: bf16[512,27], index: 0, kind: input, shape index: {}]
  %s1 = inlined_call_operand.vmem [shape: bf16[27,8], index: 1, kind: input, shape index: {}]
  %s2 = inlined_call_operand.vmem [shape: f32[1,8], index: 2, kind: input, shape index: {}]
  %s3 = inlined_call_operand.vmem [shape: f32[1,8], index: 3, kind: input, shape index: {}]
  %s4 = inlined_call_operand.vmem [shape: f32[512,8], index: 4, kind: output, shape index: {}]
  %s5 = sld [smem:[#allocation0]]
  $region57: #{tpu_custom_call.1} parent=0
    _
  %s7 = ssub.s32 1, %s5
  %s8 = scalar_select 0, %s7, %s5
  loop: start=0, step=1, limit=4
  $region2: #{tpu_custom_call.1} parent=0 // loop_pre_header
    _
  $region3: #{tpu_custom_call.1} parent=0 // loop_header
    %s10 = sphi 0, %s14
    %p11 = scmp.ge.s32.totalorder %s10, 4
    %s17 = sphi 0, %s36
    %s18 = sphi 0, %s32
    %s19 = sphi 0, %s28
    %s20 = sphi 0, %s17
    %s21 = sphi 0, %s18
    %s22 = sphi 0, %s19
    %s23 = sphi 0, %s20
    %s24 = sphi 0, %s21
    %s25 = sphi 0, %s22
    %s41 = sphi 0, %s43
    %s44 = sphi 0, %s41
    %s45 = sphi 0, %s44
    %s61 = sphi 0, %s45
    %s69 = sphi 0, %s71
    %s72 = sphi 0, %s69
    %s73 = sphi 0, %s72
    %s89 = sphi 0, %s73
    %s95 = sphi 0, %s97
    %s98 = sphi 0, %s95
    %s99 = sphi 0, %s98
    %s115 = sphi 0, %s99
    %s121 = sphi 0, %s123
    %s124 = sphi 0, %s121
    %s125 = sphi 0, %s124
    %s141 = sphi 0, %s125
    %s149 = sphi 0, %s151
    %s152 = sphi 0, %s149
    %s153 = sphi 0, %s152
    %s169 = sphi 0, %s153
  $region4: #{tpu_custom_call.1} parent=0 // loop_header_branch
    %13 = sbr.rel (%p11) target = $region8
  $region5: #{tpu_custom_call.1} parent=0 // loop_body
    %s15 = ssub.s32 %s10, 1
    %s16 = ssub.s32 %s10, 2
    %s26 = sadd.s32 1, %s19
    %p27 = scmp.ge.s32.totalorder %s26, 1
    %s28 = scalar_select %p27, 0, %s26
    %s29 = sadd.s32 1, %s18
    %s30 = scalar_select %p27, %s29, %s18
    %p31 = scmp.ge.s32.totalorder %s30, 1
    %s32 = scalar_select %p31, 0, %s30
    %s33 = sadd.s32 1, %s17
    %s34 = scalar_select %p31, %s33, %s17
    %p35 = scmp.ge.s32.totalorder %s34, 2
    %s36 = scalar_select %p35, 0, %s34
    %s37 = ssub.s32 %s17, %s36
    %s38 = ssub.s32 %s19, %s28
    %s39 = sor.u32 %s37, %s38
    %p40 = scmp.eq.s32.totalorder %s39, 0
    %s42 = sadd.s32 %s41, 1
    %s43 = scalar_select %p40, %s41, %s42
    %p46 = pneg %p40
    %p47 = scmp.eq.s32.totalorder %s10, 1
    %p48 = por %p46, %p47
    %p49 = scmp.ne.s32.totalorder %s41, %s44
    %p50 = scmp.eq.s32.totalorder %s10, 0
    %p51 = por %p49, %p50
    %p52 = scmp.ne.s32.totalorder %s41, %s44
    %p53 = scmp.eq.s32.totalorder %s15, 1
    %p54 = por %p52, %p53
    %p55 = scmp.ne.s32.totalorder %s44, %s45
    %p56 = scmp.eq.s32.totalorder %s15, 0
    %p57 = por %p55, %p56
    %p58 = scmp.ne.s32.totalorder %s44, %s45
    %p59 = scmp.eq.s32.totalorder %s16, 1
    %p60 = por %p58, %p59
    %p62 = scmp.ne.s32.totalorder %s45, %s61
    %p63 = scmp.eq.s32.totalorder %s16, 0
    %p64 = por %p62, %p63
    %s65 = ssub.s32 %s19, %s28
    %s66 = ssub.s32 %s18, %s32
    %s67 = sor.u32 %s65, %s66
    %p68 = scmp.eq.s32.totalorder %s67, 0
    %s70 = sadd.s32 %s69, 1
    %s71 = scalar_select %p68, %s69, %s70
    %p74 = pneg %p68
    %p75 = scmp.eq.s32.totalorder %s10, 1
    %p76 = por %p74, %p75
    %p77 = scmp.ne.s32.totalorder %s69, %s72
    %p78 = scmp.eq.s32.totalorder %s10, 0
    %p79 = por %p77, %p78
    %p80 = scmp.ne.s32.totalorder %s69, %s72
    %p81 = scmp.eq.s32.totalorder %s15, 1
    %p82 = por %p80, %p81
    %p83 = scmp.ne.s32.totalorder %s72, %s73
    %p84 = scmp.eq.s32.totalorder %s15, 0
    %p85 = por %p83, %p84
    %p86 = scmp.ne.s32.totalorder %s72, %s73
    %p87 = scmp.eq.s32.totalorder %s16, 1
    %p88 = por %p86, %p87
    %p90 = scmp.ne.s32.totalorder %s73, %s89
    %p91 = scmp.eq.s32.totalorder %s16, 0
    %p92 = por %p90, %p91
    %s93 = ssub.s32 %s18, %s32
    %p94 = scmp.eq.s32.totalorder %s93, 0
    %s96 = sadd.s32 %s95, 1
    %s97 = scalar_select %p94, %s95, %s96
    %p100 = pneg %p94
    %p101 = scmp.eq.s32.totalorder %s10, 1
    %p102 = por %p100, %p101
    %p103 = scmp.ne.s32.totalorder %s95, %s98
    %p104 = scmp.eq.s32.totalorder %s10, 0
    %p105 = por %p103, %p104
    %p106 = scmp.ne.s32.totalorder %s95, %s98
    %p107 = scmp.eq.s32.totalorder %s15, 1
    %p108 = por %p106, %p107
    %p109 = scmp.ne.s32.totalorder %s98, %s99
    %p110 = scmp.eq.s32.totalorder %s15, 0
    %p111 = por %p109, %p110
    %p112 = scmp.ne.s32.totalorder %s98, %s99
    %p113 = scmp.eq.s32.totalorder %s16, 1
    %p114 = por %p112, %p113
    %p116 = scmp.ne.s32.totalorder %s99, %s115
    %p117 = scmp.eq.s32.totalorder %s16, 0
    %p118 = por %p116, %p117
    %s119 = ssub.s32 %s18, %s32
    %p120 = scmp.eq.s32.totalorder %s119, 0
    %s122 = sadd.s32 %s121, 1
    %s123 = scalar_select %p120, %s121, %s122
    %p126 = pneg %p120
    %p127 = scmp.eq.s32.totalorder %s10, 1
    %p128 = por %p126, %p127
    %p129 = scmp.ne.s32.totalorder %s121, %s124
    %p130 = scmp.eq.s32.totalorder %s10, 0
    %p131 = por %p129, %p130
    %p132 = scmp.ne.s32.totalorder %s121, %s124
    %p133 = scmp.eq.s32.totalorder %s15, 1
    %p134 = por %p132, %p133
    %p135 = scmp.ne.s32.totalorder %s124, %s125
    %p136 = scmp.eq.s32.totalorder %s15, 0
    %p137 = por %p135, %p136
    %p138 = scmp.ne.s32.totalorder %s124, %s125
    %p139 = scmp.eq.s32.totalorder %s16, 1
    %p140 = por %p138, %p139
    %p142 = scmp.ne.s32.totalorder %s125, %s141
    %p143 = scmp.eq.s32.totalorder %s16, 0
    %p144 = por %p142, %p143
    %s145 = ssub.s32 %s17, %s36
    %s146 = ssub.s32 %s18, %s32
    %s147 = sor.u32 %s145, %s146
    %p148 = scmp.eq.s32.totalorder %s147, 0
    %s150 = sadd.s32 %s149, 1
    %s151 = scalar_select %p148, %s149, %s150
    %p154 = pneg %p148
    %p155 = scmp.eq.s32.totalorder %s10, 1
    %p156 = por %p154, %p155
    %p157 = scmp.ne.s32.totalorder %s149, %s152
    %p158 = scmp.eq.s32.totalorder %s10, 0
    %p159 = por %p157, %p158
    %p160 = scmp.ne.s32.totalorder %s149, %s152
    %p161 = scmp.eq.s32.totalorder %s15, 1
    %p162 = por %p160, %p161
    %p163 = scmp.ne.s32.totalorder %s152, %s153
    %p164 = scmp.eq.s32.totalorder %s15, 0
    %p165 = por %p163, %p164
    %p166 = scmp.ne.s32.totalorder %s152, %s153
    %p167 = scmp.eq.s32.totalorder %s16, 1
    %p168 = por %p166, %p167
    %p170 = scmp.ne.s32.totalorder %s153, %s169
    %p171 = scmp.eq.s32.totalorder %s16, 0
    %p172 = por %p170, %p171
    %p173 = scmp.le.s32.totalorder 1, %s10
    %p174 = scmp.lt.s32.totalorder %s10, 3
    %p175 = pnand %p173, %p174
    %p176 = pneg %p175
    // Predicated region
    $region9: #{tpu_custom_call.1} parent=5 // pred_check
      _
    $region10: #{tpu_custom_call.1} parent=5 // pred_check_branch
      %178 = sbr.rel (%p175) target = $region12
    $region11: #{tpu_custom_call.1} parent=5 // pred_region
      %s179 = ssub.s32 %s10, 1
      // Predicated region
      $region13: #{tpu_custom_call.1} parent=11 // pred_check
        %p180 = pneg %p85
      $region14: #{tpu_custom_call.1} parent=11 // pred_check_branch
        %182 = sbr.rel (%p180) target = $region16
      $region15: #{tpu_custom_call.1} parent=11 // pred_region
        %s183 = smul.u32 4, %s22
        %p184 = scmp.lt.s32.totalorder %s183, 3
        %s185 = scalar_select %p184, %s183, 3
        %p186 = scmp.lt.s32.totalorder %s21, 0
        %s187 = scalar_select %p186, %s21, 0
        %s188 = sadd.s32 %s187, %s185
        %s189 = smul.addr %s188, 4
        %s190 = scalar_lea.vmem %s1, %s189
        %s191 = smul.u32 4, %s22
      $region16: #{tpu_custom_call.1} parent=11 // pred_fallthru
        _
      // Predicated region
      $region17: #{tpu_custom_call.1} parent=11 // pred_check
        %p192 = pneg %p111
      $region18: #{tpu_custom_call.1} parent=11 // pred_check_branch
        %194 = sbr.rel (%p192) target = $region20
      $region19: #{tpu_custom_call.1} parent=11 // pred_region
        %p195 = scmp.lt.s32.totalorder %s21, 0
        %s196 = scalar_select %p195, %s21, 0
        %s197 = scalar_lea.vmem %s2, %s196
      $region20: #{tpu_custom_call.1} parent=11 // pred_fallthru
        _
      // Predicated region
      $region21: #{tpu_custom_call.1} parent=11 // pred_check
        %p198 = pneg %p137
      $region22: #{tpu_custom_call.1} parent=11 // pred_check_branch
        %200 = sbr.rel (%p198) target = $region24
      $region23: #{tpu_custom_call.1} parent=11 // pred_region
        %p201 = scmp.lt.s32.totalorder %s21, 0
        %s202 = scalar_select %p201, %s21, 0
        %s203 = scalar_lea.vmem %s3, %s202
      $region24: #{tpu_custom_call.1} parent=11 // pred_fallthru
        _
    $region12: #{tpu_custom_call.1} parent=5 // pred_fallthru
      _
    %p204 = scmp.lt.s32.totalorder %s10, 2
    // Predicated region
    $region25: #{tpu_custom_call.1} parent=5 // pred_check
      %p205 = pneg %p204
    $region26: #{tpu_custom_call.1} parent=5 // pred_check_branch
      %207 = sbr.rel (%p205) target = $region28
    $region27: #{tpu_custom_call.1} parent=5 // pred_region
      // Predicated region
      $region29: #{tpu_custom_call.1} parent=27 // pred_check
        %p208 = pneg %p51
      $region30: #{tpu_custom_call.1} parent=27 // pred_check_branch
        %210 = sbr.rel (%p208) target = $region32
      $region31: #{tpu_custom_call.1} parent=27 // pred_region
        %s211 = smul.u32 32, %s17
        %p212 = scmp.lt.s32.totalorder %s211, 63
        %s213 = scalar_select %p212, %s211, 63
        %p214 = scmp.lt.s32.totalorder %s19, 0
        %s215 = scalar_select %p214, %s19, 0
        %s216 = sadd.s32 %s215, %s213
        %s217 = smul.addr %s216, 4
        %s218 = scalar_lea.vmem %s0, %s217
        %s219 = smul.u32 32, %s17
      $region32: #{tpu_custom_call.1} parent=27 // pred_fallthru
        _
    $region28: #{tpu_custom_call.1} parent=5 // pred_fallthru
      _
    %p220 = scmp.le.s32.totalorder 1, %s10
    %p221 = scmp.lt.s32.totalorder %s10, 3
    %p222 = pnand %p220, %p221
    %p223 = pneg %p222
    // Predicated region
    $region33: #{tpu_custom_call.1} parent=5 // pred_check
      _
    $region34: #{tpu_custom_call.1} parent=5 // pred_check_branch
      %225 = sbr.rel (%p222) target = $region36
    $region35: #{tpu_custom_call.1} parent=5 // pred_region
      %s226 = ssub.s32 %s10, 1
      %s227 = smul.u32 32, %s20
      %p228 = scmp.lt.s32.totalorder %s227, 63
      %s229 = scalar_select %p228, %s227, 63
      %p230 = scmp.lt.s32.totalorder %s22, 0
      %s231 = scalar_select %p230, %s22, 0
      %s232 = sadd.s32 %s231, %s229
      %s233 = smul.addr %s232, 4
      %s234 = scalar_lea.vmem %s0, %s233
      %p235 = pneg %p57
      %p236 = pneg %p54
      %s237 = smul.u32 4, %s22
      %p238 = scmp.lt.s32.totalorder %s237, 3
      %s239 = scalar_select %p238, %s237, 3
      %p240 = scmp.lt.s32.totalorder %s21, 0
      %s241 = scalar_select %p240, %s21, 0
      %s242 = sadd.s32 %s241, %s239
      %s243 = smul.addr %s242, 4
      %s244 = scalar_lea.vmem %s1, %s243
      %p245 = pneg %p85
      %p246 = pneg %p82
      %p247 = scmp.lt.s32.totalorder %s21, 0
      %s248 = scalar_select %p247, %s21, 0
      %s249 = scalar_lea.vmem %s2, %s248
      %p250 = pneg %p111
      %p251 = pneg %p108
      %p252 = scmp.lt.s32.totalorder %s21, 0
      %s253 = scalar_select %p252, %s21, 0
      %s254 = scalar_lea.vmem %s3, %s253
      %p255 = pneg %p137
      %p256 = pneg %p134
      %p257 = pneg %p165
      %p258 = pneg %p162
      %s259 = smul.u32 32, %s20
      %p260 = scmp.lt.s32.totalorder %s259, 63
      %s261 = scalar_select %p260, %s259, 63
      %p262 = scmp.lt.s32.totalorder %s21, 0
      %s263 = scalar_select %p262, %s21, 0
      %s264 = sadd.s32 %s263, %s261
      %s265 = smul.addr %s264, 8
      %s266 = scalar_lea.vmem %s4, %s265
      %s267 = smul.u32 32, %s20
      %p268 = scmp.lt.s32.totalorder %s267, 63
      %s269 = scalar_select %p268, %s267, 63
      %p270 = scmp.lt.s32.totalorder %s22, 0
      %s271 = scalar_select %p270, %s22, 0
      %s272 = sadd.s32 %s271, %s269
      %s273 = smul.addr %s272, 4
      %s274 = scalar_lea.vmem %s0, %s273
      %s275 = smul.u32 32, %s20
      %s276 = smul.u32 4, %s22
      %p277 = scmp.lt.s32.totalorder %s276, 3
      %s278 = scalar_select %p277, %s276, 3
      %p279 = scmp.lt.s32.totalorder %s21, 0
      %s280 = scalar_select %p279, %s21, 0
      %s281 = sadd.s32 %s280, %s278
      %s282 = smul.addr %s281, 4
      %s283 = scalar_lea.vmem %s1, %s282
      %s284 = smul.u32 4, %s22
      %p285 = scmp.lt.s32.totalorder %s21, 0
      %s286 = scalar_select %p285, %s21, 0
      %s287 = scalar_lea.vmem %s2, %s286
      %p288 = scmp.lt.s32.totalorder %s21, 0
      %s289 = scalar_select %p288, %s21, 0
      %s290 = scalar_lea.vmem %s3, %s289
      %s291 = smul.u32 32, %s20
      %p292 = scmp.lt.s32.totalorder %s291, 63
      %s293 = scalar_select %p292, %s291, 63
      %p294 = scmp.lt.s32.totalorder %s21, 0
      %s295 = scalar_select %p294, %s21, 0
      %s296 = sadd.s32 %s295, %s293
      %s297 = smul.addr %s296, 8
      %s298 = scalar_lea.vmem %s4, %s297
      %s299 = smul.u32 32, %s20
      %p301 = scmp.eq.s32.totalorder %s22, 0
      // Predicated region
      $region37: #{tpu_custom_call.1} parent=35 // pred_check
        %p302 = pneg %p301
      $region38: #{tpu_custom_call.1} parent=35 // pred_check_branch
        %304 = sbr.rel (%p302) target = $region40
      $region39: #{tpu_custom_call.1} parent=35 // pred_region
        %vm305 = vcmask 64512
        %306 = vst.msk [vmem:[#allocation2] sm:$0xff] %vm305, 0.0
        %307 = vst.msk [vmem:[#allocation2 + $0x8] sm:$0xff] %vm305, 0.0
        %308 = vst.msk [vmem:[#allocation2 + $0x10] sm:$0xff] %vm305, 0.0
        %309 = vst.msk [vmem:[#allocation2 + $0x18] sm:$0xff] %vm305, 0.0
        %310 = vst.msk [vmem:[#allocation2 + $0x20] sm:$0xff] %vm305, 0.0
        %311 = vst.msk [vmem:[#allocation2 + $0x28] sm:$0xff] %vm305, 0.0
        %312 = vst.msk [vmem:[#allocation2 + $0x30] sm:$0xff] %vm305, 0.0
        %313 = vst.msk [vmem:[#allocation2 + $0x38] sm:$0xff] %vm305, 0.0
        %314 = vst.msk [vmem:[#allocation2 + $0x40] sm:$0xff] %vm305, 0.0
        %315 = vst.msk [vmem:[#allocation2 + $0x48] sm:$0xff] %vm305, 0.0
        %316 = vst.msk [vmem:[#allocation2 + $0x50] sm:$0xff] %vm305, 0.0
        %317 = vst.msk [vmem:[#allocation2 + $0x58] sm:$0xff] %vm305, 0.0
        %318 = vst.msk [vmem:[#allocation2 + $0x60] sm:$0xff] %vm305, 0.0
        %319 = vst.msk [vmem:[#allocation2 + $0x68] sm:$0xff] %vm305, 0.0
        %320 = vst.msk [vmem:[#allocation2 + $0x70] sm:$0xff] %vm305, 0.0
        %321 = vst.msk [vmem:[#allocation2 + $0x78] sm:$0xff] %vm305, 0.0
        %322 = vst.msk [vmem:[#allocation2 + $0x80] sm:$0xff] %vm305, 0.0
        %323 = vst.msk [vmem:[#allocation2 + $0x88] sm:$0xff] %vm305, 0.0
        %324 = vst.msk [vmem:[#allocation2 + $0x90] sm:$0xff] %vm305, 0.0
        %325 = vst.msk [vmem:[#allocation2 + $0x98] sm:$0xff] %vm305, 0.0
        %326 = vst.msk [vmem:[#allocation2 + $0xa0] sm:$0xff] %vm305, 0.0
        %327 = vst.msk [vmem:[#allocation2 + $0xa8] sm:$0xff] %vm305, 0.0
        %328 = vst.msk [vmem:[#allocation2 + $0xb0] sm:$0xff] %vm305, 0.0
        %329 = vst.msk [vmem:[#allocation2 + $0xb8] sm:$0xff] %vm305, 0.0
        %330 = vst.msk [vmem:[#allocation2 + $0xc0] sm:$0xff] %vm305, 0.0
        %331 = vst.msk [vmem:[#allocation2 + $0xc8] sm:$0xff] %vm305, 0.0
        %332 = vst.msk [vmem:[#allocation2 + $0xd0] sm:$0xff] %vm305, 0.0
        %333 = vst.msk [vmem:[#allocation2 + $0xd8] sm:$0xff] %vm305, 0.0
        %334 = vst.msk [vmem:[#allocation2 + $0xe0] sm:$0xff] %vm305, 0.0
        %335 = vst.msk [vmem:[#allocation2 + $0xe8] sm:$0xff] %vm305, 0.0
        %336 = vst.msk [vmem:[#allocation2 + $0xf0] sm:$0xff] %vm305, 0.0
        %337 = vst.msk [vmem:[#allocation2 + $0xf8] sm:$0xff] %vm305, 0.0
      $region40: #{tpu_custom_call.1} parent=35 // pred_fallthru
        _
      %v338 = vld [vmem:[%s274] sm:$0xf]
      %v339 = vld [vmem:[%s274 + $0x4] sm:$0xf]
      %v340 = vld [vmem:[%s274 + $0x8] sm:$0xf]
      %v341 = vld [vmem:[%s274 + $0xc] sm:$0xf]
      %v342 = vld [vmem:[%s274 + $0x10] sm:$0xf]
      %v343 = vld [vmem:[%s274 + $0x14] sm:$0xf]
      %v344 = vld [vmem:[%s274 + $0x18] sm:$0xf]
      %v345 = vld [vmem:[%s274 + $0x1c] sm:$0xf]
      %v346 = vld [vmem:[%s274 + $0x20] sm:$0xf]
      %v347 = vld [vmem:[%s274 + $0x24] sm:$0xf]
      %v348 = vld [vmem:[%s274 + $0x28] sm:$0xf]
      %v349 = vld [vmem:[%s274 + $0x2c] sm:$0xf]
      %v350 = vld [vmem:[%s274 + $0x30] sm:$0xf]
      %v351 = vld [vmem:[%s274 + $0x34] sm:$0xf]
      %v352 = vld [vmem:[%s274 + $0x38] sm:$0xf]
      %v353 = vld [vmem:[%s274 + $0x3c] sm:$0xf]
      %v354 = vld [vmem:[%s274 + $0x40] sm:$0xf]
      %v355 = vld [vmem:[%s274 + $0x44] sm:$0xf]
      %v356 = vld [vmem:[%s274 + $0x48] sm:$0xf]
      %v357 = vld [vmem:[%s274 + $0x4c] sm:$0xf]
      %v358 = vld [vmem:[%s274 + $0x50] sm:$0xf]
      %v359 = vld [vmem:[%s274 + $0x54] sm:$0xf]
      %v360 = vld [vmem:[%s274 + $0x58] sm:$0xf]
      %v361 = vld [vmem:[%s274 + $0x5c] sm:$0xf]
      %v362 = vld [vmem:[%s274 + $0x60] sm:$0xf]
      %v363 = vld [vmem:[%s274 + $0x64] sm:$0xf]
      %v364 = vld [vmem:[%s274 + $0x68] sm:$0xf]
      %v365 = vld [vmem:[%s274 + $0x6c] sm:$0xf]
      %v366 = vld [vmem:[%s274 + $0x70] sm:$0xf]
      %v367 = vld [vmem:[%s274 + $0x74] sm:$0xf]
      %v368 = vld [vmem:[%s274 + $0x78] sm:$0xf]
      %v369 = vld [vmem:[%s274 + $0x7c] sm:$0xf]
      %v370 = vld [vmem:[#allocation2] sm:$0xff]
      %v371 = vld [vmem:[#allocation2 + $0x8] sm:$0xff]
      %v372 = vld [vmem:[#allocation2 + $0x10] sm:$0xff]
      %v373 = vld [vmem:[#allocation2 + $0x18] sm:$0xff]
      %v374 = vld [vmem:[#allocation2 + $0x20] sm:$0xff]
      %v375 = vld [vmem:[#allocation2 + $0x28] sm:$0xff]
      %v376 = vld [vmem:[#allocation2 + $0x30] sm:$0xff]
      %v377 = vld [vmem:[#allocation2 + $0x38] sm:$0xff]
      %v378 = vld [vmem:[#allocation2 + $0x40] sm:$0xff]
      %v379 = vld [vmem:[#allocation2 + $0x48] sm:$0xff]
      %v380 = vld [vmem:[#allocation2 + $0x50] sm:$0xff]
      %v381 = vld [vmem:[#allocation2 + $0x58] sm:$0xff]
      %v382 = vld [vmem:[#allocation2 + $0x60] sm:$0xff]
      %v383 = vld [vmem:[#allocation2 + $0x68] sm:$0xff]
      %v384 = vld [vmem:[#allocation2 + $0x70] sm:$0xff]
      %v385 = vld [vmem:[#allocation2 + $0x78] sm:$0xff]
      %v386 = vld [vmem:[#allocation2 + $0x80] sm:$0xff]
      %v387 = vld [vmem:[#allocation2 + $0x88] sm:$0xff]
      %v388 = vld [vmem:[#allocation2 + $0x90] sm:$0xff]
      %v389 = vld [vmem:[#allocation2 + $0x98] sm:$0xff]
      %v390 = vld [vmem:[#allocation2 + $0xa0] sm:$0xff]
      %v391 = vld [vmem:[#allocation2 + $0xa8] sm:$0xff]
      %v392 = vld [vmem:[#allocation2 + $0xb0] sm:$0xff]
      %v393 = vld [vmem:[#allocation2 + $0xb8] sm:$0xff]
      %v394 = vld [vmem:[#allocation2 + $0xc0] sm:$0xff]
      %v395 = vld [vmem:[#allocation2 + $0xc8] sm:$0xff]
      %v396 = vld [vmem:[#allocation2 + $0xd0] sm:$0xff]
      %v397 = vld [vmem:[#allocation2 + $0xd8] sm:$0xff]
      %v398 = vld [vmem:[#allocation2 + $0xe0] sm:$0xff]
      %v399 = vld [vmem:[#allocation2 + $0xe8] sm:$0xff]
      %v400 = vld [vmem:[#allocation2 + $0xf0] sm:$0xff]
      %v401 = vld [vmem:[#allocation2 + $0xf8] sm:$0xff]
      %v402 = vld [vmem:[%s283] sm:$0xf]
      %v403 = vld [vmem:[%s283 + $0x4] sm:$0xf]
      %v404 = vld [vmem:[%s283 + $0x8] sm:$0xf]
      %v405 = vld [vmem:[%s283 + $0xc] sm:$0x3]
      %v438 = vunpack.c.l.b16 %v338
      %v439 = vunpack.c.l.b16 %v339
      %v440 = vunpack.c.l.b16 %v340
      %v441 = vunpack.c.l.b16 %v341
      %v442 = vunpack.c.l.b16 %v342
      %v443 = vunpack.c.l.b16 %v343
      %v444 = vunpack.c.l.b16 %v344
      %v445 = vunpack.c.l.b16 %v345
      %v446 = vunpack.c.l.b16 %v346
      %v447 = vunpack.c.l.b16 %v347
      %v448 = vunpack.c.l.b16 %v348
      %v449 = vunpack.c.l.b16 %v349
      %v450 = vunpack.c.l.b16 %v350
      %v451 = vunpack.c.l.b16 %v351
      %v452 = vunpack.c.l.b16 %v352
      %v453 = vunpack.c.l.b16 %v353
      %v454 = vunpack.c.l.b16 %v354
      %v455 = vunpack.c.l.b16 %v355
      %v456 = vunpack.c.l.b16 %v356
      %v457 = vunpack.c.l.b16 %v357
      %v458 = vunpack.c.l.b16 %v358
      %v459 = vunpack.c.l.b16 %v359
      %v460 = vunpack.c.l.b16 %v360
      %v461 = vunpack.c.l.b16 %v361
      %v462 = vunpack.c.l.b16 %v362
      %v463 = vunpack.c.l.b16 %v363
      %v464 = vunpack.c.l.b16 %v364
      %v465 = vunpack.c.l.b16 %v365
      %v466 = vunpack.c.l.b16 %v366
      %v467 = vunpack.c.l.b16 %v367
      %v468 = vunpack.c.l.b16 %v368
      %v469 = vunpack.c.l.b16 %v369
      %v470 = vpack.c.b16 %v439, %v438
      %v471 = vpack.c.b16 %v441, %v440
      %v472 = vpack.c.b16 %v443, %v442
      %v473 = vpack.c.b16 %v445, %v444
      %v474 = vpack.c.b16 %v447, %v446
      %v475 = vpack.c.b16 %v449, %v448
      %v476 = vpack.c.b16 %v451, %v450
      %v477 = vpack.c.b16 %v453, %v452
      %v478 = vpack.c.b16 %v455, %v454
      %v479 = vpack.c.b16 %v457, %v456
      %v480 = vpack.c.b16 %v459, %v458
      %v481 = vpack.c.b16 %v461, %v460
      %v482 = vpack.c.b16 %v463, %v462
      %v483 = vpack.c.b16 %v465, %v464
      %v484 = vpack.c.b16 %v467, %v466
      %v485 = vpack.c.b16 %v469, %v468
      %v490 = vunpack.c.l.b16 %v402
      %v491 = vunpack.c.l.b16 %v403
      %v492 = vunpack.c.l.b16 %v404
      %v493 = vunpack.c.l.b16 %v405
      %v494 = vpack.c.b16 %v491, %v490
      %v495 = vpack.c.b16 %v493, %v492
      %vm497 = vcmask 220160
      %v499 = vsel %vm497, %v470, 0
      %v502 = vsel %vm497, %v471, 0
      %v505 = vsel %vm497, %v472, 0
      %v508 = vsel %vm497, %v473, 0
      %v511 = vsel %vm497, %v474, 0
      %v514 = vsel %vm497, %v475, 0
      %v517 = vsel %vm497, %v476, 0
      %v520 = vsel %vm497, %v477, 0
      %v523 = vsel %vm497, %v478, 0
      %v526 = vsel %vm497, %v479, 0
      %v529 = vsel %vm497, %v480, 0
      %v532 = vsel %vm497, %v481, 0
      %v535 = vsel %vm497, %v482, 0
      %v538 = vsel %vm497, %v483, 0
      %v541 = vsel %vm497, %v484, 0
      %v544 = vsel %vm497, %v485, 0
      %vm546 = vcmask 1044480
      %vm547 = vcmask 1045504
      %v548 = vsel %vm546, 4294967295, 65535
      %v549 = vsel %vm547, %v548, 0
      %v551 = vand.u32 %v495, %v549
      %553 = vmatprep.subr.bf16.mxu0 0
      %554 = vmatpush1.bf16.msra.mxu0 %v494
      %555 = vmatprep.subr.bf16.mxu0 0
      %556 = vmatpush1.bf16.msra.mxu0 %v551
      %557 = vmatprep.subr.bf16.mxu0 0
      %558 = vmatpush1.bf16.msra.mxu0 0
      %559 = vmatprep.subr.bf16.mxu0 0
      %560 = vmatpush1.bf16.msra.mxu0 0
      %561 = vmatprep.subr.bf16.mxu0 0
      %562 = vmatpush1.bf16.msra.mxu0 0
      %563 = vmatprep.subr.bf16.mxu0 0
      %564 = vmatpush1.bf16.msra.mxu0 0
      %565 = vmatprep.subr.bf16.mxu0 0
      %566 = vmatpush1.bf16.msra.mxu0 0
      %567 = vmatprep.subr.bf16.mxu0 0
      %568 = vmatpush1.bf16.msra.mxu0 0
      %569 = vmatprep.subr.bf16.mxu0 0
      %570 = vmatpush1.bf16.msra.mxu0 0
      %571 = vmatprep.subr.bf16.mxu0 0
      %572 = vmatpush1.bf16.msra.mxu0 0
      %573 = vmatprep.subr.bf16.mxu0 0
      %574 = vmatpush1.bf16.msra.mxu0 0
      %575 = vmatprep.subr.bf16.mxu0 0
      %576 = vmatpush1.bf16.msra.mxu0 0
      %577 = vmatprep.subr.bf16.mxu0 0
      %578 = vmatpush1.bf16.msra.mxu0 0
      %579 = vmatprep.subr.bf16.mxu0 0
      %580 = vmatpush1.bf16.msra.mxu0 0
      %581 = vmatprep.subr.bf16.mxu0 0
      %582 = vmatpush1.bf16.msra.mxu0 0
      %583 = vmatprep.subr.bf16.mxu0 0
      %584 = vmatpush1.bf16.msra.mxu0 0
      %585 = vmatprep.mubr.bf16.mxu0 0
      %586 = vmatmul.mubr.bf16.gmra.mrb[0].mxu0 %v499
      %v587 = vpop.f32.mrb[0].mxu0
      %v588 = vadd.f32 0.0, %v587
      %v589 = vpop.f32.mrb[0].mxu0
      %v590 = vpop.f32.mrb[0].mxu0
      %v591 = vadd.f32 0.0, %v590
      %v592 = vpop.f32.mrb[0].mxu0
      %593 = vmatprep.mubr.bf16.mxu0 0
      %594 = vmatmul.mubr.bf16.gmra.mrb[0].mxu0 %v502
      %v595 = vpop.f32.mrb[0].mxu0
      %v596 = vadd.f32 0.0, %v595
      %v597 = vpop.f32.mrb[0].mxu0
      %v598 = vpop.f32.mrb[0].mxu0
      %v599 = vadd.f32 0.0, %v598
      %v600 = vpop.f32.mrb[0].mxu0
      %601 = vmatprep.mubr.bf16.mxu0 0
      %602 = vmatmul.mubr.bf16.gmra.mrb[0].mxu0 %v505
      %v603 = vpop.f32.mrb[0].mxu0
      %v604 = vadd.f32 0.0, %v603
      %v605 = vpop.f32.mrb[0].mxu0
      %v606 = vpop.f32.mrb[0].mxu0
      %v607 = vadd.f32 0.0, %v606
      %v608 = vpop.f32.mrb[0].mxu0
      %609 = vmatprep.mubr.bf16.mxu0 0
      %610 = vmatmul.mubr.bf16.gmra.mrb[0].mxu0 %v508
      %v611 = vpop.f32.mrb[0].mxu0
      %v612 = vadd.f32 0.0, %v611
      %v613 = vpop.f32.mrb[0].mxu0
      %v614 = vpop.f32.mrb[0].mxu0
      %v615 = vadd.f32 0.0, %v614
      %v616 = vpop.f32.mrb[0].mxu0
      %617 = vmatprep.mubr.bf16.mxu0 0
      %618 = vmatmul.mubr.bf16.gmra.mrb[0].mxu0 %v511
      %v619 = vpop.f32.mrb[0].mxu0
      %v620 = vadd.f32 0.0, %v619
      %v621 = vpop.f32.mrb[0].mxu0
      %v622 = vpop.f32.mrb[0].mxu0
      %v623 = vadd.f32 0.0, %v622
      %v624 = vpop.f32.mrb[0].mxu0
      %625 = vmatprep.mubr.bf16.mxu0 0
      %626 = vmatmul.mubr.bf16.gmra.mrb[0].mxu0 %v514
      %v627 = vpop.f32.mrb[0].mxu0
      %v628 = vadd.f32 0.0, %v627
      %v629 = vpop.f32.mrb[0].mxu0
      %v630 = vpop.f32.mrb[0].mxu0
      %v631 = vadd.f32 0.0, %v630
      %v632 = vpop.f32.mrb[0].mxu0
      %633 = vmatprep.mubr.bf16.mxu0 0
      %634 = vmatmul.mubr.bf16.gmra.mrb[0].mxu0 %v517
      %v635 = vpop.f32.mrb[0].mxu0
      %v636 = vadd.f32 0.0, %v635
      %v637 = vpop.f32.mrb[0].mxu0
      %v638 = vpop.f32.mrb[0].mxu0
      %v639 = vadd.f32 0.0, %v638
      %v640 = vpop.f32.mrb[0].mxu0
      %641 = vmatprep.mubr.bf16.mxu0 0
      %642 = vmatmul.mubr.bf16.gmra.mrb[0].mxu0 %v520
      %v643 = vpop.f32.mrb[0].mxu0
      %v644 = vadd.f32 0.0, %v643
      %v645 = vpop.f32.mrb[0].mxu0
      %v646 = vpop.f32.mrb[0].mxu0
      %v647 = vadd.f32 0.0, %v646
      %v648 = vpop.f32.mrb[0].mxu0
      %649 = vmatprep.mubr.bf16.mxu0 0
      %650 = vmatmul.mubr.bf16.gmra.mrb[0].mxu0 %v523
      %v651 = vpop.f32.mrb[0].mxu0
      %v652 = vadd.f32 0.0, %v651
      %v653 = vpop.f32.mrb[0].mxu0
      %v654 = vpop.f32.mrb[0].mxu0
      %v655 = vadd.f32 0.0, %v654
      %v656 = vpop.f32.mrb[0].mxu0
      %657 = vmatprep.mubr.bf16.mxu0 0
      %658 = vmatmul.mubr.bf16.gmra.mrb[0].mxu0 %v526
      %v659 = vpop.f32.mrb[0].mxu0
      %v660 = vadd.f32 0.0, %v659
      %v661 = vpop.f32.mrb[0].mxu0
      %v662 = vpop.f32.mrb[0].mxu0
      %v663 = vadd.f32 0.0, %v662
      %v664 = vpop.f32.mrb[0].mxu0
      %665 = vmatprep.mubr.bf16.mxu0 0
      %666 = vmatmul.mubr.bf16.gmra.mrb[0].mxu0 %v529
      %v667 = vpop.f32.mrb[0].mxu0
      %v668 = vadd.f32 0.0, %v667
      %v669 = vpop.f32.mrb[0].mxu0
      %v670 = vpop.f32.mrb[0].mxu0
      %v671 = vadd.f32 0.0, %v670
      %v672 = vpop.f32.mrb[0].mxu0
      %673 = vmatprep.mubr.bf16.mxu0 0
      %674 = vmatmul.mubr.bf16.gmra.mrb[0].mxu0 %v532
      %v675 = vpop.f32.mrb[0].mxu0
      %v676 = vadd.f32 0.0, %v675
      %v677 = vpop.f32.mrb[0].mxu0
      %v678 = vpop.f32.mrb[0].mxu0
      %v679 = vadd.f32 0.0, %v678
      %v680 = vpop.f32.mrb[0].mxu0
      %681 = vmatprep.mubr.bf16.mxu0 0
      %682 = vmatmul.mubr.bf16.gmra.mrb[0].mxu0 %v535
      %v683 = vpop.f32.mrb[0].mxu0
      %v684 = vadd.f32 0.0, %v683
      %v685 = vpop.f32.mrb[0].mxu0
      %v686 = vpop.f32.mrb[0].mxu0
      %v687 = vadd.f32 0.0, %v686
      %v688 = vpop.f32.mrb[0].mxu0
      %689 = vmatprep.mubr.bf16.mxu0 0
      %690 = vmatmul.mubr.bf16.gmra.mrb[0].mxu0 %v538
      %v691 = vpop.f32.mrb[0].mxu0
      %v692 = vadd.f32 0.0, %v691
      %v693 = vpop.f32.mrb[0].mxu0
      %v694 = vpop.f32.mrb[0].mxu0
      %v695 = vadd.f32 0.0, %v694
      %v696 = vpop.f32.mrb[0].mxu0
      %697 = vmatprep.mubr.bf16.mxu0 0
      %698 = vmatmul.mubr.bf16.gmra.mrb[0].mxu0 %v541
      %v699 = vpop.f32.mrb[0].mxu0
      %v700 = vadd.f32 0.0, %v699
      %v701 = vpop.f32.mrb[0].mxu0
      %v702 = vpop.f32.mrb[0].mxu0
      %v703 = vadd.f32 0.0, %v702
      %v704 = vpop.f32.mrb[0].mxu0
      %705 = vmatprep.mubr.bf16.mxu0 0
      %706 = vmatmul.mubr.bf16.gmra.mrb[0].mxu0 %v544
      %v707 = vpop.f32.mrb[0].mxu0
      %v708 = vadd.f32 0.0, %v707
      %v709 = vpop.f32.mrb[0].mxu0
      %v710 = vpop.f32.mrb[0].mxu0
      %v711 = vadd.f32 0.0, %v710
      %v712 = vpop.f32.mrb[0].mxu0
      %713 = vdwg.mxu0
      %v714 = vadd.f32 %v370, %v588
      %v715 = vadd.f32 %v371, %v591
      %v716 = vadd.f32 %v372, %v596
      %v717 = vadd.f32 %v373, %v599
      %v718 = vadd.f32 %v374, %v604
      %v719 = vadd.f32 %v375, %v607
      %v720 = vadd.f32 %v376, %v612
      %v721 = vadd.f32 %v377, %v615
      %v722 = vadd.f32 %v378, %v620
      %v723 = vadd.f32 %v379, %v623
      %v724 = vadd.f32 %v380, %v628
      %v725 = vadd.f32 %v381, %v631
      %v726 = vadd.f32 %v382, %v636
      %v727 = vadd.f32 %v383, %v639
      %v728 = vadd.f32 %v384, %v644
      %v729 = vadd.f32 %v385, %v647
      %v730 = vadd.f32 %v386, %v652
      %v731 = vadd.f32 %v387, %v655
      %v732 = vadd.f32 %v388, %v660
      %v733 = vadd.f32 %v389, %v663
      %v734 = vadd.f32 %v390, %v668
      %v735 = vadd.f32 %v391, %v671
      %v736 = vadd.f32 %v392, %v676
      %v737 = vadd.f32 %v393, %v679
      %v738 = vadd.f32 %v394, %v684
      %v739 = vadd.f32 %v395, %v687
      %v740 = vadd.f32 %v396, %v692
      %v741 = vadd.f32 %v397, %v695
      %v742 = vadd.f32 %v398, %v700
      %v743 = vadd.f32 %v399, %v703
      %v744 = vadd.f32 %v400, %v708
      %v745 = vadd.f32 %v401, %v711
      %vm746 = vcmask 64512
      %747 = vst.msk [vmem:[#allocation2] sm:$0xff] %vm746, %v714
      %748 = vst.msk [vmem:[#allocation2 + $0x8] sm:$0xff] %vm746, %v715
      %749 = vst.msk [vmem:[#allocation2 + $0x10] sm:$0xff] %vm746, %v716
      %750 = vst.msk [vmem:[#allocation2 + $0x18] sm:$0xff] %vm746, %v717
      %751 = vst.msk [vmem:[#allocation2 + $0x20] sm:$0xff] %vm746, %v718
      %752 = vst.msk [vmem:[#allocation2 + $0x28] sm:$0xff] %vm746, %v719
      %753 = vst.msk [vmem:[#allocation2 + $0x30] sm:$0xff] %vm746, %v720
      %754 = vst.msk [vmem:[#allocation2 + $0x38] sm:$0xff] %vm746, %v721
      %755 = vst.msk [vmem:[#allocation2 + $0x40] sm:$0xff] %vm746, %v722
      %756 = vst.msk [vmem:[#allocation2 + $0x48] sm:$0xff] %vm746, %v723
      %757 = vst.msk [vmem:[#allocation2 + $0x50] sm:$0xff] %vm746, %v724
      %758 = vst.msk [vmem:[#allocation2 + $0x58] sm:$0xff] %vm746, %v725
      %759 = vst.msk [vmem:[#allocation2 + $0x60] sm:$0xff] %vm746, %v726
      %760 = vst.msk [vmem:[#allocation2 + $0x68] sm:$0xff] %vm746, %v727
      %761 = vst.msk [vmem:[#allocation2 + $0x70] sm:$0xff] %vm746, %v728
      %762 = vst.msk [vmem:[#allocation2 + $0x78] sm:$0xff] %vm746, %v729
      %763 = vst.msk [vmem:[#allocation2 + $0x80] sm:$0xff] %vm746, %v730
      %764 = vst.msk [vmem:[#allocation2 + $0x88] sm:$0xff] %vm746, %v731
      %765 = vst.msk [vmem:[#allocation2 + $0x90] sm:$0xff] %vm746, %v732
      %766 = vst.msk [vmem:[#allocation2 + $0x98] sm:$0xff] %vm746, %v733
      %767 = vst.msk [vmem:[#allocation2 + $0xa0] sm:$0xff] %vm746, %v734
      %768 = vst.msk [vmem:[#allocation2 + $0xa8] sm:$0xff] %vm746, %v735
      %769 = vst.msk [vmem:[#allocation2 + $0xb0] sm:$0xff] %vm746, %v736
      %770 = vst.msk [vmem:[#allocation2 + $0xb8] sm:$0xff] %vm746, %v737
      %771 = vst.msk [vmem:[#allocation2 + $0xc0] sm:$0xff] %vm746, %v738
      %772 = vst.msk [vmem:[#allocation2 + $0xc8] sm:$0xff] %vm746, %v739
      %773 = vst.msk [vmem:[#allocation2 + $0xd0] sm:$0xff] %vm746, %v740
      %774 = vst.msk [vmem:[#allocation2 + $0xd8] sm:$0xff] %vm746, %v741
      %775 = vst.msk [vmem:[#allocation2 + $0xe0] sm:$0xff] %vm746, %v742
      %776 = vst.msk [vmem:[#allocation2 + $0xe8] sm:$0xff] %vm746, %v743
      %777 = vst.msk [vmem:[#allocation2 + $0xf0] sm:$0xff] %vm746, %v744
      %778 = vst.msk [vmem:[#allocation2 + $0xf8] sm:$0xff] %vm746, %v745
      // Predicated region
      $region41: #{tpu_custom_call.1} parent=35 // pred_check
        %p779 = pneg %p301
      $region42: #{tpu_custom_call.1} parent=35 // pred_check_branch
        %781 = sbr.rel (%p779) target = $region44
      $region43: #{tpu_custom_call.1} parent=35 // pred_region
        %v782 = vld [vmem:[#allocation2] sm:$0xff]
        %v783 = vld [vmem:[#allocation2 + $0x8] sm:$0xff]
        %v784 = vld [vmem:[#allocation2 + $0x10] sm:$0xff]
        %v785 = vld [vmem:[#allocation2 + $0x18] sm:$0xff]
        %v786 = vld [vmem:[#allocation2 + $0x20] sm:$0xff]
        %v787 = vld [vmem:[#allocation2 + $0x28] sm:$0xff]
        %v788 = vld [vmem:[#allocation2 + $0x30] sm:$0xff]
        %v789 = vld [vmem:[#allocation2 + $0x38] sm:$0xff]
        %v790 = vld [vmem:[#allocation2 + $0x40] sm:$0xff]
        %v791 = vld [vmem:[#allocation2 + $0x48] sm:$0xff]
        %v792 = vld [vmem:[#allocation2 + $0x50] sm:$0xff]
        %v793 = vld [vmem:[#allocation2 + $0x58] sm:$0xff]
        %v794 = vld [vmem:[#allocation2 + $0x60] sm:$0xff]
        %v795 = vld [vmem:[#allocation2 + $0x68] sm:$0xff]
        %v796 = vld [vmem:[#allocation2 + $0x70] sm:$0xff]
        %v797 = vld [vmem:[#allocation2 + $0x78] sm:$0xff]
        %v798 = vld [vmem:[#allocation2 + $0x80] sm:$0xff]
        %v799 = vld [vmem:[#allocation2 + $0x88] sm:$0xff]
        %v800 = vld [vmem:[#allocation2 + $0x90] sm:$0xff]
        %v801 = vld [vmem:[#allocation2 + $0x98] sm:$0xff]
        %v802 = vld [vmem:[#allocation2 + $0xa0] sm:$0xff]
        %v803 = vld [vmem:[#allocation2 + $0xa8] sm:$0xff]
        %v804 = vld [vmem:[#allocation2 + $0xb0] sm:$0xff]
        %v805 = vld [vmem:[#allocation2 + $0xb8] sm:$0xff]
        %v806 = vld [vmem:[#allocation2 + $0xc0] sm:$0xff]
        %v807 = vld [vmem:[#allocation2 + $0xc8] sm:$0xff]
        %v808 = vld [vmem:[#allocation2 + $0xd0] sm:$0xff]
        %v809 = vld [vmem:[#allocation2 + $0xd8] sm:$0xff]
        %v810 = vld [vmem:[#allocation2 + $0xe0] sm:$0xff]
        %v811 = vld [vmem:[#allocation2 + $0xe8] sm:$0xff]
        %v812 = vld [vmem:[#allocation2 + $0xf0] sm:$0xff]
        %v813 = vld [vmem:[#allocation2 + $0xf8] sm:$0xff]
        %v814 = vld [vmem:[%s287] sm:$0x1]
        %v816 = vlaneseq
        %v817 = vshrl.u32 %v816, 7
        %v818 = vsub.s32 0, %v817
        %v819 = vrot.slane %v814, %v818
        %v821 = vmul.f32 %v782, %v819
        %v822 = vmul.f32 %v783, %v819
        %v823 = vmul.f32 %v784, %v819
        %v824 = vmul.f32 %v785, %v819
        %v825 = vmul.f32 %v786, %v819
        %v826 = vmul.f32 %v787, %v819
        %v827 = vmul.f32 %v788, %v819
        %v828 = vmul.f32 %v789, %v819
        %v829 = vmul.f32 %v790, %v819
        %v830 = vmul.f32 %v791, %v819
        %v831 = vmul.f32 %v792, %v819
        %v832 = vmul.f32 %v793, %v819
        %v833 = vmul.f32 %v794, %v819
        %v834 = vmul.f32 %v795, %v819
        %v835 = vmul.f32 %v796, %v819
        %v836 = vmul.f32 %v797, %v819
        %v837 = vmul.f32 %v798, %v819
        %v838 = vmul.f32 %v799, %v819
        %v839 = vmul.f32 %v800, %v819
        %v840 = vmul.f32 %v801, %v819
        %v841 = vmul.f32 %v802, %v819
        %v842 = vmul.f32 %v803, %v819
        %v843 = vmul.f32 %v804, %v819
        %v844 = vmul.f32 %v805, %v819
        %v845 = vmul.f32 %v806, %v819
        %v846 = vmul.f32 %v807, %v819
        %v847 = vmul.f32 %v808, %v819
        %v848 = vmul.f32 %v809, %v819
        %v849 = vmul.f32 %v810, %v819
        %v850 = vmul.f32 %v811, %v819
        %v851 = vmul.f32 %v812, %v819
        %v852 = vmul.f32 %v813, %v819
        %v853 = vld [vmem:[%s290] sm:$0x1]
        %v855 = vlaneseq
        %v856 = vshrl.u32 %v855, 7
        %v857 = vsub.s32 0, %v856
        %v858 = vrot.slane %v853, %v857
        %v860 = vadd.f32 %v821, %v858
        %v861 = vadd.f32 %v822, %v858
        %v862 = vadd.f32 %v823, %v858
        %v863 = vadd.f32 %v824, %v858
        %v864 = vadd.f32 %v825, %v858
        %v865 = vadd.f32 %v826, %v858
        %v866 = vadd.f32 %v827, %v858
        %v867 = vadd.f32 %v828, %v858
        %v868 = vadd.f32 %v829, %v858
        %v869 = vadd.f32 %v830, %v858
        %v870 = vadd.f32 %v831, %v858
        %v871 = vadd.f32 %v832, %v858
        %v872 = vadd.f32 %v833, %v858
        %v873 = vadd.f32 %v834, %v858
        %v874 = vadd.f32 %v835, %v858
        %v875 = vadd.f32 %v836, %v858
        %v876 = vadd.f32 %v837, %v858
        %v877 = vadd.f32 %v838, %v858
        %v878 = vadd.f32 %v839, %v858
        %v879 = vadd.f32 %v840, %v858
        %v880 = vadd.f32 %v841, %v858
        %v881 = vadd.f32 %v842, %v858
        %v882 = vadd.f32 %v843, %v858
        %v883 = vadd.f32 %v844, %v858
        %v884 = vadd.f32 %v845, %v858
        %v885 = vadd.f32 %v846, %v858
        %v886 = vadd.f32 %v847, %v858
        %v887 = vadd.f32 %v848, %v858
        %v888 = vadd.f32 %v849, %v858
        %v889 = vadd.f32 %v850, %v858
        %v890 = vadd.f32 %v851, %v858
        %v891 = vadd.f32 %v852, %v858
        %v892 = vmax.f32 %v860, 0.0
        %v893 = vmax.f32 %v861, 0.0
        %v894 = vmax.f32 %v862, 0.0
        %v895 = vmax.f32 %v863, 0.0
        %v896 = vmax.f32 %v864, 0.0
        %v897 = vmax.f32 %v865, 0.0
        %v898 = vmax.f32 %v866, 0.0
        %v899 = vmax.f32 %v867, 0.0
        %v900 = vmax.f32 %v868, 0.0
        %v901 = vmax.f32 %v869, 0.0
        %v902 = vmax.f32 %v870, 0.0
        %v903 = vmax.f32 %v871, 0.0
        %v904 = vmax.f32 %v872, 0.0
        %v905 = vmax.f32 %v873, 0.0
        %v906 = vmax.f32 %v874, 0.0
        %v907 = vmax.f32 %v875, 0.0
        %v908 = vmax.f32 %v876, 0.0
        %v909 = vmax.f32 %v877, 0.0
        %v910 = vmax.f32 %v878, 0.0
        %v911 = vmax.f32 %v879, 0.0
        %v912 = vmax.f32 %v880, 0.0
        %v913 = vmax.f32 %v881, 0.0
        %v914 = vmax.f32 %v882, 0.0
        %v915 = vmax.f32 %v883, 0.0
        %v916 = vmax.f32 %v884, 0.0
        %v917 = vmax.f32 %v885, 0.0
        %v918 = vmax.f32 %v886, 0.0
        %v919 = vmax.f32 %v887, 0.0
        %v920 = vmax.f32 %v888, 0.0
        %v921 = vmax.f32 %v889, 0.0
        %v922 = vmax.f32 %v890, 0.0
        %v923 = vmax.f32 %v891, 0.0
        %924 = vst.msk [vmem:[%s298] sm:$0xff] %vm746, %v892
        %925 = vst.msk [vmem:[%s298 + $0x8] sm:$0xff] %vm746, %v893
        %926 = vst.msk [vmem:[%s298 + $0x10] sm:$0xff] %vm746, %v894
        %927 = vst.msk [vmem:[%s298 + $0x18] sm:$0xff] %vm746, %v895
        %928 = vst.msk [vmem:[%s298 + $0x20] sm:$0xff] %vm746, %v896
        %929 = vst.msk [vmem:[%s298 + $0x28] sm:$0xff] %vm746, %v897
        %930 = vst.msk [vmem:[%s298 + $0x30] sm:$0xff] %vm746, %v898
        %931 = vst.msk [vmem:[%s298 + $0x38] sm:$0xff] %vm746, %v899
        %932 = vst.msk [vmem:[%s298 + $0x40] sm:$0xff] %vm746, %v900
        %933 = vst.msk [vmem:[%s298 + $0x48] sm:$0xff] %vm746, %v901
        %934 = vst.msk [vmem:[%s298 + $0x50] sm:$0xff] %vm746, %v902
        %935 = vst.msk [vmem:[%s298 + $0x58] sm:$0xff] %vm746, %v903
        %936 = vst.msk [vmem:[%s298 + $0x60] sm:$0xff] %vm746, %v904
        %937 = vst.msk [vmem:[%s298 + $0x68] sm:$0xff] %vm746, %v905
        %938 = vst.msk [vmem:[%s298 + $0x70] sm:$0xff] %vm746, %v906
        %939 = vst.msk [vmem:[%s298 + $0x78] sm:$0xff] %vm746, %v907
        %940 = vst.msk [vmem:[%s298 + $0x80] sm:$0xff] %vm746, %v908
        %941 = vst.msk [vmem:[%s298 + $0x88] sm:$0xff] %vm746, %v909
        %942 = vst.msk [vmem:[%s298 + $0x90] sm:$0xff] %vm746, %v910
        %943 = vst.msk [vmem:[%s298 + $0x98] sm:$0xff] %vm746, %v911
        %944 = vst.msk [vmem:[%s298 + $0xa0] sm:$0xff] %vm746, %v912
        %945 = vst.msk [vmem:[%s298 + $0xa8] sm:$0xff] %vm746, %v913
        %946 = vst.msk [vmem:[%s298 + $0xb0] sm:$0xff] %vm746, %v914
        %947 = vst.msk [vmem:[%s298 + $0xb8] sm:$0xff] %vm746, %v915
        %948 = vst.msk [vmem:[%s298 + $0xc0] sm:$0xff] %vm746, %v916
        %949 = vst.msk [vmem:[%s298 + $0xc8] sm:$0xff] %vm746, %v917
        %950 = vst.msk [vmem:[%s298 + $0xd0] sm:$0xff] %vm746, %v918
        %951 = vst.msk [vmem:[%s298 + $0xd8] sm:$0xff] %vm746, %v919
        %952 = vst.msk [vmem:[%s298 + $0xe0] sm:$0xff] %vm746, %v920
        %953 = vst.msk [vmem:[%s298 + $0xe8] sm:$0xff] %vm746, %v921
        %954 = vst.msk [vmem:[%s298 + $0xf0] sm:$0xff] %vm746, %v922
        %955 = vst.msk [vmem:[%s298 + $0xf8] sm:$0xff] %vm746, %v923
      $region44: #{tpu_custom_call.1} parent=35 // pred_fallthru
        _
      %s956 = smul.u32 32, %s20
      %p957 = scmp.lt.s32.totalorder %s956, 63
      %s958 = scalar_select %p957, %s956, 63
      %p959 = scmp.lt.s32.totalorder %s21, 0
      %s960 = scalar_select %p959, %s21, 0
      %s961 = sadd.s32 %s960, %s958
      %s962 = smul.addr %s961, 8
      %s963 = scalar_lea.vmem %s4, %s962
      // Predicated region
      $region45: #{tpu_custom_call.1} parent=35 // pred_check
        %p964 = pneg %p162
      $region46: #{tpu_custom_call.1} parent=35 // pred_check_branch
        %966 = sbr.rel (%p964) target = $region48
      $region47: #{tpu_custom_call.1} parent=35 // pred_region
        %s967 = smul.u32 32, %s20
      $region48: #{tpu_custom_call.1} parent=35 // pred_fallthru
        _
    $region36: #{tpu_custom_call.1} parent=5 // pred_fallthru
      _
    %p968 = scmp.le.s32.totalorder 2, %s10
    // Predicated region
    $region49: #{tpu_custom_call.1} parent=5 // pred_check
      %p969 = pneg %p968
    $region50: #{tpu_custom_call.1} parent=5 // pred_check_branch
      %971 = sbr.rel (%p969) target = $region52
    $region51: #{tpu_custom_call.1} parent=5 // pred_region
      %s972 = ssub.s32 %s10, 2
      // Predicated region
      $region53: #{tpu_custom_call.1} parent=51 // pred_check
        %p973 = pneg %p168
      $region54: #{tpu_custom_call.1} parent=51 // pred_check_branch
        %975 = sbr.rel (%p973) target = $region56
      $region55: #{tpu_custom_call.1} parent=51 // pred_region
        %s976 = smul.u32 32, %s23
        %p977 = scmp.lt.s32.totalorder %s976, 63
        %s978 = scalar_select %p977, %s976, 63
        %p979 = scmp.lt.s32.totalorder %s24, 0
        %s980 = scalar_select %p979, %s24, 0
        %s981 = sadd.s32 %s980, %s978
        %s982 = smul.addr %s981, 8
        %s983 = scalar_lea.vmem %s4, %s982
      $region56: #{tpu_custom_call.1} parent=51 // pred_fallthru
        _
    $region52: #{tpu_custom_call.1} parent=5 // pred_fallthru
      _
  $region6: #{tpu_custom_call.1} parent=0 // loop_footer
    %s14 = sadd.s32 1, %s10
  $region7: #{tpu_custom_call.1} parent=0 // loop_footer_branch
    %9 = sbr.rel target = $region3
  $region8: #{tpu_custom_call.1} parent=0 // loop_exit
    _

</llo_original>
